<compile_context>
chip_gen: v6e
topology: v6e:2x2x1
jax: 0.10.0
libtpu: 0.0.40
codegen_flags: <defaults>
</compile_context>

<pallas_src>
import jax
import jax.numpy as jnp
from jax import lax
from jax.experimental import pallas as pl
from jax.experimental.pallas import tpu as pltpu

HIDDEN_SIZE = 32
_LANE = 128
_SUBLANE = 8
_MAX_LANE_CHUNK = 512


def _round_up(x, m):
    return ((x + m - 1) // m) * m


def _tile_bytes(rows, cols, itemsize=4):
    """f32 VMEM footprint of a (rows, cols) slab after (8,128) tiling."""
    return _round_up(max(rows, 1), _SUBLANE) * _round_up(max(cols, 1), _LANE) * itemsize


def _per_batch_step_bytes(E_aug, Lc, Ld_pad, D, use_mask):
    """Double-buffered VMEM bytes one batch contributes to a grid step."""
    in_b = _tile_bytes(E_aug, Lc) + _tile_bytes(Ld_pad, D)
    if use_mask:
        in_b += _tile_bytes(1, Lc)
    out_b = _tile_bytes(Ld_pad, Lc)
    return 2 * (in_b + out_b)


def _vmem_capacity_bytes():
    try:
        info = pltpu.get_tpu_info()
        cap = getattr(info, "vmem_capacity_bytes", None)
        if cap:
            return int(cap)
    except Exception:
        pass
    return 64 << 20  # v7x per-TC physical VMEM: the smallest across generations.


def _pick_batch_block(B, per_batch_bytes, budget_bytes):
    """Largest divisor of B fitting the VMEM budget, preferring >=2 (even) grid steps."""
    if B <= 1:
        return 1
    max_bt = max(1, min(B, budget_bytes // max(per_batch_bytes, 1)))
    divisors = [bt for bt in range(1, B + 1) if B % bt == 0 and bt <= max_bt]
    # Keep at least 2 grid steps (pipelining; and work for both v7x TensorCores).
    cand = [bt for bt in divisors if B // bt >= 2] or divisors
    even = [bt for bt in cand if (B // bt) % 2 == 0]
    pool = even or cand
    return max(pool)


def _make_kernel(use_mask):
    def kernel(eT_ref, d_ref, wf_ref, bf_ref, *rest):
        if use_mask:
            mask_ref, out_ref = rest
        else:
            (out_ref,) = rest

        Bt, Ld_pad, D = d_ref.shape
        E_aug = wf_ref.shape[1]

        # Folded decoder projection: single MXU matmul over the whole batch block.
        d_flat = d_ref[...].reshape(Bt * Ld_pad, D)
        proj = jnp.dot(d_flat, wf_ref[...],
                       preferred_element_type=jnp.float32) + bf_ref[...]
        proj = proj.reshape(Bt, Ld_pad, E_aug)

        # Bilinear score: canonical batched [M,K]@[K,N] against the pre-transposed
        # (and ones-augmented) encoder block — no in-kernel transpose.
        s = lax.dot_general(
            proj, eT_ref[...],
            dimension_numbers=(((2,), (1,)), ((0,), (0,))),
            preferred_element_type=jnp.float32)

        if use_mask:
            m = mask_ref[...]                     # (Bt, 1, Lc); mask is exactly 0/1
            s = jnp.where(m == jnp.float32(0.0), jnp.float32(-1.0e8), s)

        out_ref[...] = s

    return kernel


def qe_attention(e_outputs, d_outputs, params, masks=None, batch_block=None):
    """e_outputs: (B, Le, E), d_outputs: (B, Ld, D), masks: (B, Le) or None."""
    B, Le, E = e_outputs.shape
    _, Ld, D = d_outputs.shape

    f32 = jnp.float32
    e_outputs = e_outputs.astype(f32)
    d_outputs = d_outputs.astype(f32)

    # ---- offline weight folding:  s = (d @ Wf + bf) @ e^T + (d @ vb + c) ----
    we = params["we"].astype(f32)            # (H, E)
    be = params["be"].astype(f32)            # (H,)
    wd = params["wd"].astype(f32)            # (H, D)
    bd = params["bd"].astype(f32)            # (H,)
    u = params["u"][0].astype(f32)           # (H, H)   num_labels == 1

    wdu = wd.T @ u                           # (D, H) = Wd^T U
    bdu = bd @ u                             # (H,)   = bd U
    wf = wdu @ we                            # (D, E)
    bf = bdu @ we                            # (E,)
    vb = wdu @ be                            # (D,)
    c = jnp.dot(bdu, be)                     # ()

    E_aug = E + 1
    wf_aug = jnp.concatenate([wf, vb[:, None]], axis=1)                    # (D, E+1)
    bf_aug = jnp.concatenate([bf, c.reshape(1)], axis=0).reshape(1, E_aug)  # (1, E+1)

    # ---- layout prep: pad Ld/Le, pre-transpose encoder, append ones row ----
    Ld_pad = _round_up(Ld, _SUBLANE)
    Le_pad = _round_up(Le, _LANE)
    if Le_pad <= _MAX_LANE_CHUNK:
        Lc = Le_pad
    else:
        Lc = max(cs for cs in (512, 384, 256, 128) if Le_pad % cs == 0)
    n_chunks = Le_pad // Lc

    eT = jnp.transpose(e_outputs, (0, 2, 1))                               # (B, E, Le)
    eT_aug = jnp.concatenate([eT, jnp.ones((B, 1, Le), f32)], axis=1)      # (B, E+1, Le)
    if Le_pad != Le:
        eT_aug = jnp.pad(eT_aug, ((0, 0), (0, 0), (0, Le_pad - Le)))

    d_pad = d_outputs
    if Ld_pad != Ld:
        d_pad = jnp.pad(d_pad, ((0, 0), (0, Ld_pad - Ld), (0, 0)))

    use_mask = masks is not None

    # ---- VMEM-aware batch packing + explicit scoped VMEM limit ----
    cap = _vmem_capacity_bytes()
    vmem_limit = min((cap * 3) // 4, 128 << 20)
    budget = cap // 2                          # headroom for weights / compiler scratch
    per_batch = _per_batch_step_bytes(E_aug, Lc, Ld_pad, D, use_mask)
    if batch_block is None:
        batch_block = _pick_batch_block(B, per_batch, budget)
    assert B % batch_block == 0, "batch_block must divide the batch size"
    Bt = batch_block
    grid = (B // Bt, n_chunks)

    in_arrays = [eT_aug, d_pad, wf_aug, bf_aug]
    in_specs = [
        pl.BlockSpec((Bt, E_aug, Lc), lambda g, j: (g, 0, j)),   # encoder^T (+ ones row)
        pl.BlockSpec((Bt, Ld_pad, D), lambda g, j: (g, 0, 0)),   # decoder (resident over j)
        pl.BlockSpec((D, E_aug), lambda g, j: (0, 0)),           # folded weight
        pl.BlockSpec((1, E_aug), lambda g, j: (0, 0)),           # folded bias
    ]
    if use_mask:
        m = masks.astype(f32)
        if Le_pad != Le:
            m = jnp.pad(m, ((0, 0), (0, Le_pad - Le)))           # padded cols masked out
        in_arrays.append(m.reshape(B, 1, Le_pad))
        in_specs.append(pl.BlockSpec((Bt, 1, Lc), lambda g, j: (g, 0, j)))

    out = pl.pallas_call(
        _make_kernel(use_mask),
        out_shape=jax.ShapeDtypeStruct((B, Ld_pad, Le_pad), f32),
        grid_spec=pltpu.PrefetchScalarGridSpec(
            num_scalar_prefetch=0,
            grid=grid,
            in_specs=in_specs,
            out_specs=pl.BlockSpec((Bt, Ld_pad, Lc), lambda g, j: (g, 0, j)),
        ),
        compiler_params=pltpu.CompilerParams(
            dimension_semantics=("parallel", "parallel"),
            vmem_limit_bytes=int(vmem_limit)),
    )(*in_arrays)

    return out[:, :Ld, :Le]


def qe_attention_ref(e_outputs, d_outputs, params, masks=None):
    """Pure-JAX reference of the PyTorch forward pass (unfused order)."""
    e_p = e_outputs @ params["we"].T + params["be"]
    d_p = d_outputs @ params["wd"].T + params["bd"]
    out = jnp.einsum("bih,hk,bjk->bij", d_p, params["u"][0], e_p)
    if masks is not None:
        out = jnp.where(masks[:, None, :] == 0, jnp.float32(-1.0e8), out)
    return out


def init_params(key, encoder_size, decoder_size, hidden_size, num_labels=1):
    k1, k2, k3, k4, k5 = jax.random.split(key, 5)
    # nn.Linear default: U(-1/sqrt(fan_in), 1/sqrt(fan_in))
    lim_e = 1.0 / jnp.sqrt(encoder_size)
    lim_d = 1.0 / jnp.sqrt(decoder_size)
    we = jax.random.uniform(k1, (hidden_size, encoder_size), jnp.float32, -lim_e, lim_e)
    be = jax.random.uniform(k2, (hidden_size,), jnp.float32, -lim_e, lim_e)
    wd = jax.random.uniform(k3, (hidden_size, decoder_size), jnp.float32, -lim_d, lim_d)
    bd = jax.random.uniform(k4, (hidden_size,), jnp.float32, -lim_d, lim_d)
    # xavier_normal_ for U: std = sqrt(2 / (fan_in + fan_out))
    std_u = jnp.sqrt(2.0 / (hidden_size + hidden_size))
    u = std_u * jax.random.normal(k5, (num_labels, hidden_size, hidden_size), jnp.float32)
    return {"we": we, "be": be, "wd": wd, "bd": bd, "u": u}


if __name__ == "__main__":
    key = jax.random.PRNGKey(0)
    k_e, k_d, k_m, k_p = jax.random.split(key, 4)

    B = 2
    split_num = 8
    Ld = split_num            # length_decoder
    Le = split_num + 2        # length_encoder
    encoder_size = 32
    decoder_size = 32

    e_outputs = jax.random.normal(k_e, (B, Le, encoder_size), jnp.float32)
    d_outputs = jax.random.normal(k_d, (B, Ld, decoder_size), jnp.float32)
    masks = (jax.random.uniform(k_m, (B, Le)) > 0.3).astype(jnp.float32)

    params = init_params(k_p, encoder_size, decoder_size, HIDDEN_SIZE, num_labels=1)

    # masked path
    out = jax.block_until_ready(qe_attention(e_outputs, d_outputs, params, masks))
    ref = qe_attention_ref(e_outputs, d_outputs, params, masks)
    assert out.shape == (B, Ld, Le)
    assert jnp.allclose(out, ref, atol=1e-4, rtol=1e-4), "mismatch vs pure-JAX reference (masked)"

    # no-mask path (separate kernel variant: no mask DMA / where)
    out_nm = jax.block_until_ready(qe_attention(e_outputs, d_outputs, params, None))
    ref_nm = qe_attention_ref(e_outputs, d_outputs, params, None)
    assert jnp.allclose(out_nm, ref_nm, atol=1e-4, rtol=1e-4), "mismatch vs pure-JAX reference (no mask)"

    print("KERNEL_OK")
</pallas_src>

<mosaic_0001>
module attributes {stable_mosaic.version = 11 : i64} {
  func.func @kernel(%arg0: i32, %arg1: i32, %arg2: memref<1x33x128xf32, #tpu.memory_space<vmem>>, %arg3: memref<1x8x32xf32, #tpu.memory_space<vmem>>, %arg4: memref<32x33xf32, #tpu.memory_space<vmem>>, %arg5: memref<1x33xf32, #tpu.memory_space<vmem>>, %arg6: memref<1x1x128xf32, #tpu.memory_space<vmem>>, %arg7: memref<1x8x128xf32, #tpu.memory_space<vmem>>) attributes {dimension_semantics = [#tpu.dimension_semantics<parallel>, #tpu.dimension_semantics<parallel>], iteration_bounds = array<i64: 2, 1>, scalar_prefetch = 0 : i64, scratch_operands = 0 : i64, tpu.core_type = #tpu.core_type<tc>, window_params = [{transform_indices = @transform_0, window_bounds = array<i64: 1, 33, 128>}, {transform_indices = @transform_1, window_bounds = array<i64: 1, 8, 32>}, {pipeline_mode = #tpu.pipeline_mode<synchronous>, transform_indices = @transform_2, window_bounds = array<i64: 32, 33>}, {pipeline_mode = #tpu.pipeline_mode<synchronous>, transform_indices = @transform_3, window_bounds = array<i64: 1, 33>}, {transform_indices = @transform_4, window_bounds = array<i64: 1, 1, 128>}, {transform_indices = @transform_5, window_bounds = array<i64: 1, 8, 128>}]} {
    %c0 = arith.constant 0 : index
    %c0_0 = arith.constant 0 : index
    %c0_1 = arith.constant 0 : index
    %0 = vector.load %arg3[%c0, %c0_0, %c0_1] : memref<1x8x32xf32, #tpu.memory_space<vmem>>, vector<1x8x32xf32>
    %1 = vector.shape_cast %0 : vector<1x8x32xf32> to vector<8x32xf32>
    %c0_2 = arith.constant 0 : index
    %c0_3 = arith.constant 0 : index
    %2 = vector.load %arg4[%c0_2, %c0_3] : memref<32x33xf32, #tpu.memory_space<vmem>>, vector<32x33xf32>
    %cst = arith.constant dense<0.000000e+00> : vector<8x33xf32>
    %3 = tpu.matmul %1, %2, %cst {dimension_numbers = #tpu.dot_dimension_numbers<[1], [0], [0], [1], [0, 0, 1, 1], [], []>} : vector<8x32xf32>, vector<32x33xf32>, vector<8x33xf32> -> vector<8x33xf32>
    %c0_4 = arith.constant 0 : index
    %c0_5 = arith.constant 0 : index
    %4 = vector.load %arg5[%c0_4, %c0_5] : memref<1x33xf32, #tpu.memory_space<vmem>>, vector<1x33xf32>
    %5 = vector.broadcast %4 : vector<1x33xf32> to vector<8x33xf32>
    %6 = arith.addf %3, %5 : vector<8x33xf32>
    %7 = vector.shape_cast %6 : vector<8x33xf32> to vector<1x8x33xf32>
    %c0_6 = arith.constant 0 : index
    %c0_7 = arith.constant 0 : index
    %c0_8 = arith.constant 0 : index
    %8 = vector.load %arg2[%c0_6, %c0_7, %c0_8] : memref<1x33x128xf32, #tpu.memory_space<vmem>>, vector<1x33x128xf32>
    %cst_9 = arith.constant dense<0.000000e+00> : vector<1x8x128xf32>
    %9 = tpu.matmul %7, %8, %cst_9 {dimension_numbers = #tpu.dot_dimension_numbers<[2], [1], [1], [2], [0, 0, 0, 1, 1, 2], [0], [0]>} : vector<1x8x33xf32>, vector<1x33x128xf32>, vector<1x8x128xf32> -> vector<1x8x128xf32>
    %c0_10 = arith.constant 0 : index
    %c0_11 = arith.constant 0 : index
    %c0_12 = arith.constant 0 : index
    %10 = vector.load %arg6[%c0_10, %c0_11, %c0_12] : memref<1x1x128xf32, #tpu.memory_space<vmem>>, vector<1x1x128xf32>
    %cst_13 = arith.constant 0.000000e+00 : f32
    %11 = vector.broadcast %cst_13 : f32 to vector<1x1x128xf32>
    %12 = arith.cmpf oeq, %10, %11 : vector<1x1x128xf32>
    %cst_14 = arith.constant -1.000000e+08 : f32
    %13 = vector.shape_cast %12 : vector<1x1x128xi1> to vector<1x1x128xi1>
    %14 = vector.broadcast %13 : vector<1x1x128xi1> to vector<1x8x128xi1>
    %15 = vector.broadcast %cst_14 : f32 to vector<1x8x128xf32>
    %16 = arith.select %14, %15, %9 : vector<1x8x128xi1>, vector<1x8x128xf32>
    %c0_15 = arith.constant 0 : index
    %c0_16 = arith.constant 0 : index
    %c0_17 = arith.constant 0 : index
    %17 = vector.load %arg7[%c0_15, %c0_16, %c0_17] : memref<1x8x128xf32, #tpu.memory_space<vmem>>, vector<1x8x128xf32>
    tpu.vector_store %arg7[%c0_15, %c0_16, %c0_17], %16 {strides = array<i32>} : memref<1x8x128xf32, #tpu.memory_space<vmem>>, vector<1x8x128xf32>,
    return
  }
  func.func @transform_0(%arg0: i32, %arg1: i32) -> (i32, i32, i32) {
    %c0_i32 = arith.constant 0 : i32
    %c0_i32_0 = arith.constant 0 : i32
    return %arg0, %c0_i32, %arg1 : i32, i32, i32
  }
  func.func @transform_1(%arg0: i32, %arg1: i32) -> (i32, i32, i32) {
    %c0_i32 = arith.constant 0 : i32
    %c0_i32_0 = arith.constant 0 : i32
    %c0_i32_1 = arith.constant 0 : i32
    return %arg0, %c0_i32, %c0_i32_0 : i32, i32, i32
  }
  func.func @transform_2(%arg0: i32, %arg1: i32) -> (i32, i32) {
    %c0_i32 = arith.constant 0 : i32
    %c0_i32_0 = arith.constant 0 : i32
    %c0_i32_1 = arith.constant 0 : i32
    return %c0_i32, %c0_i32_0 : i32, i32
  }
  func.func @transform_3(%arg0: i32, %arg1: i32) -> (i32, i32) {
    %c0_i32 = arith.constant 0 : i32
    %c0_i32_0 = arith.constant 0 : i32
    %c0_i32_1 = arith.constant 0 : i32
    return %c0_i32, %c0_i32_0 : i32, i32
  }
  func.func @transform_4(%arg0: i32, %arg1: i32) -> (i32, i32, i32) {
    %c0_i32 = arith.constant 0 : i32
    %c0_i32_0 = arith.constant 0 : i32
    return %arg0, %c0_i32, %arg1 : i32, i32, i32
  }
  func.func @transform_5(%arg0: i32, %arg1: i32) -> (i32, i32, i32) {
    %c0_i32 = arith.constant 0 : i32
    %c0_i32_0 = arith.constant 0 : i32
    return %arg0, %c0_i32, %arg1 : i32, i32, i32
  }
}

</mosaic_0001>

<llo_original>
// kernel: tpu_custom_call.1
$region0: #{tpu_custom_call.1}
  #allocation0 [shape = 'u32[]', space=smem, size = 0x4, offset = 0x4, fixed_abs, tag = 'smem constant byte address 0x4 - core index']
  #allocation1 [shape = 'u32[144,128]{1,0:T(1,128)}', space=vmem, size = 0x12000, scoped, tag = 'internal scratch']
  %s0 = inlined_call_operand.vmem [shape: f32[2,33,128], index: 0, kind: input, shape index: {}]
  %s1 = inlined_call_operand.vmem [shape: f32[2,8,32], index: 1, kind: input, shape index: {}]
  %s2 = inlined_call_operand.vmem [shape: f32[32,33], index: 2, kind: input, shape index: {}]
  %s3 = inlined_call_operand.vmem [shape: f32[1,33], index: 3, kind: input, shape index: {}]
  %s4 = inlined_call_operand.vmem [shape: f32[2,1,128], index: 4, kind: input, shape index: {}]
  %s5 = inlined_call_operand.hbm [shape: f32[2,8,128], index: 5, kind: output, shape index: {}]
  %s6 = sld [smem:[#allocation0]]
  $region53: #{tpu_custom_call.1} parent=0
    _
  %s8 = ssub.s32 1, %s6
  %s9 = scalar_select 0, %s8, %s6
  $region1: #{tpu_custom_call.1} parent=0
    #allocation2 [shape = 'u8[8192]{0}', space=vmem, size = 0x2000, scoped, tag = 'output window, operand 0']
    #allocation3 [shape = 's32[2]{0}', space=sflag, size = 0x8, scoped, tag = 'scoped memory for tpu_custom_call.1']
    %10 = vsyncpa [#allocation3], 0
    %s11 = scalar_lea.sflag [#allocation3], 1
    %12 = vsyncpa %s11, 0
    loop: start=0, step=1, limit=4
    $region2: #{tpu_custom_call.1} parent=1 // loop_pre_header
      _
    $region3: #{tpu_custom_call.1} parent=1 // loop_header
      %s14 = sphi 0, %s18
      %p15 = scmp.ge.s32.totalorder %s14, 4
      %s21 = sphi 0, %s33
      %s22 = sphi 0, %s29
      %s23 = sphi 0, %s21
      %s24 = sphi 0, %s22
      %s25 = sphi 0, %s23
      %s26 = sphi 0, %s24
      %s38 = sphi 0, %s40
      %s41 = sphi 0, %s38
      %s42 = sphi 0, %s41
      %s58 = sphi 0, %s42
      %s64 = sphi 0, %s66
      %s67 = sphi 0, %s64
      %s68 = sphi 0, %s67
      %s84 = sphi 0, %s68
      %s88 = sphi 0, %s88
      %s90 = sphi 0, %s88
      %s91 = sphi 0, %s90
      %s105 = sphi 0, %s91
      %s109 = sphi 0, %s109
      %s111 = sphi 0, %s109
      %s112 = sphi 0, %s111
      %s126 = sphi 0, %s112
      %s134 = sphi 0, %s136
      %s137 = sphi 0, %s134
      %s138 = sphi 0, %s137
      %s154 = sphi 0, %s138
      %s162 = sphi 0, %s164
      %s165 = sphi 0, %s162
      %s166 = sphi 0, %s165
      %s182 = sphi 0, %s166
    $region4: #{tpu_custom_call.1} parent=1 // loop_header_branch
      %17 = sbr.rel (%p15) target = $region8
    $region5: #{tpu_custom_call.1} parent=1 // loop_body
      %s19 = ssub.s32 %s14, 1
      %s20 = ssub.s32 %s14, 2
      %s27 = sadd.s32 1, %s22
      %p28 = scmp.ge.s32.totalorder %s27, 1
      %s29 = scalar_select %p28, 0, %s27
      %s30 = sadd.s32 1, %s21
      %s31 = scalar_select %p28, %s30, %s21
      %p32 = scmp.ge.s32.totalorder %s31, 2
      %s33 = scalar_select %p32, 0, %s31
      %s34 = ssub.s32 %s21, %s33
      %s35 = ssub.s32 %s22, %s29
      %s36 = sor.u32 %s34, %s35
      %p37 = scmp.eq.s32.totalorder %s36, 0
      %s39 = sadd.s32 %s38, 1
      %s40 = scalar_select %p37, %s38, %s39
      %p43 = pneg %p37
      %p44 = scmp.eq.s32.totalorder %s14, 1
      %p45 = por %p43, %p44
      %p46 = scmp.ne.s32.totalorder %s38, %s41
      %p47 = scmp.eq.s32.totalorder %s14, 0
      %p48 = por %p46, %p47
      %p49 = scmp.ne.s32.totalorder %s38, %s41
      %p50 = scmp.eq.s32.totalorder %s19, 1
      %p51 = por %p49, %p50
      %p52 = scmp.ne.s32.totalorder %s41, %s42
      %p53 = scmp.eq.s32.totalorder %s19, 0
      %p54 = por %p52, %p53
      %p55 = scmp.ne.s32.totalorder %s41, %s42
      %p56 = scmp.eq.s32.totalorder %s20, 1
      %p57 = por %p55, %p56
      %p59 = scmp.ne.s32.totalorder %s42, %s58
      %p60 = scmp.eq.s32.totalorder %s20, 0
      %p61 = por %p59, %p60
      %s62 = ssub.s32 %s21, %s33
      %p63 = scmp.eq.s32.totalorder %s62, 0
      %s65 = sadd.s32 %s64, 1
      %s66 = scalar_select %p63, %s64, %s65
      %p69 = pneg %p63
      %p70 = scmp.eq.s32.totalorder %s14, 1
      %p71 = por %p69, %p70
      %p72 = scmp.ne.s32.totalorder %s64, %s67
      %p73 = scmp.eq.s32.totalorder %s14, 0
      %p74 = por %p72, %p73
      %p75 = scmp.ne.s32.totalorder %s64, %s67
      %p76 = scmp.eq.s32.totalorder %s19, 1
      %p77 = por %p75, %p76
      %p78 = scmp.ne.s32.totalorder %s67, %s68
      %p79 = scmp.eq.s32.totalorder %s19, 0
      %p80 = por %p78, %p79
      %p81 = scmp.ne.s32.totalorder %s67, %s68
      %p82 = scmp.eq.s32.totalorder %s20, 1
      %p83 = por %p81, %p82
      %p85 = scmp.ne.s32.totalorder %s68, %s84
      %p86 = scmp.eq.s32.totalorder %s20, 0
      %p87 = por %p85, %p86
      %s89 = sadd.s32 %s88, 1
      %p92 = scmp.eq.s32.totalorder %s14, 1
      %p93 = scmp.ne.s32.totalorder %s88, %s90
      %p94 = scmp.eq.s32.totalorder %s14, 0
      %p95 = por %p93, %p94
      %p96 = scmp.ne.s32.totalorder %s88, %s90
      %p97 = scmp.eq.s32.totalorder %s19, 1
      %p98 = por %p96, %p97
      %p99 = scmp.ne.s32.totalorder %s90, %s91
      %p100 = scmp.eq.s32.totalorder %s19, 0
      %p101 = por %p99, %p100
      %p102 = scmp.ne.s32.totalorder %s90, %s91
      %p103 = scmp.eq.s32.totalorder %s20, 1
      %p104 = por %p102, %p103
      %p106 = scmp.ne.s32.totalorder %s91, %s105
      %p107 = scmp.eq.s32.totalorder %s20, 0
      %p108 = por %p106, %p107
      %s110 = sadd.s32 %s109, 1
      %p113 = scmp.eq.s32.totalorder %s14, 1
      %p114 = scmp.ne.s32.totalorder %s109, %s111
      %p115 = scmp.eq.s32.totalorder %s14, 0
      %p116 = por %p114, %p115
      %p117 = scmp.ne.s32.totalorder %s109, %s111
      %p118 = scmp.eq.s32.totalorder %s19, 1
      %p119 = por %p117, %p118
      %p120 = scmp.ne.s32.totalorder %s111, %s112
      %p121 = scmp.eq.s32.totalorder %s19, 0
      %p122 = por %p120, %p121
      %p123 = scmp.ne.s32.totalorder %s111, %s112
      %p124 = scmp.eq.s32.totalorder %s20, 1
      %p125 = por %p123, %p124
      %p127 = scmp.ne.s32.totalorder %s112, %s126
      %p128 = scmp.eq.s32.totalorder %s20, 0
      %p129 = por %p127, %p128
      %s130 = ssub.s32 %s21, %s33
      %s131 = ssub.s32 %s22, %s29
      %s132 = sor.u32 %s130, %s131
      %p133 = scmp.eq.s32.totalorder %s132, 0
      %s135 = sadd.s32 %s134, 1
      %s136 = scalar_select %p133, %s134, %s135
      %p139 = pneg %p133
      %p140 = scmp.eq.s32.totalorder %s14, 1
      %p141 = por %p139, %p140
      %p142 = scmp.ne.s32.totalorder %s134, %s137
      %p143 = scmp.eq.s32.totalorder %s14, 0
      %p144 = por %p142, %p143
      %p145 = scmp.ne.s32.totalorder %s134, %s137
      %p146 = scmp.eq.s32.totalorder %s19, 1
      %p147 = por %p145, %p146
      %p148 = scmp.ne.s32.totalorder %s137, %s138
      %p149 = scmp.eq.s32.totalorder %s19, 0
      %p150 = por %p148, %p149
      %p151 = scmp.ne.s32.totalorder %s137, %s138
      %p152 = scmp.eq.s32.totalorder %s20, 1
      %p153 = por %p151, %p152
      %p155 = scmp.ne.s32.totalorder %s138, %s154
      %p156 = scmp.eq.s32.totalorder %s20, 0
      %p157 = por %p155, %p156
      %s158 = ssub.s32 %s21, %s33
      %s159 = ssub.s32 %s22, %s29
      %s160 = sor.u32 %s158, %s159
      %p161 = scmp.eq.s32.totalorder %s160, 0
      %s163 = sadd.s32 %s162, 1
      %s164 = scalar_select %p161, %s162, %s163
      %p167 = pneg %p161
      %p168 = scmp.eq.s32.totalorder %s14, 1
      %p169 = por %p167, %p168
      %p170 = scmp.ne.s32.totalorder %s162, %s165
      %p171 = scmp.eq.s32.totalorder %s14, 0
      %p172 = por %p170, %p171
      %p173 = scmp.ne.s32.totalorder %s162, %s165
      %p174 = scmp.eq.s32.totalorder %s19, 1
      %p175 = por %p173, %p174
      %p176 = scmp.ne.s32.totalorder %s165, %s166
      %p177 = scmp.eq.s32.totalorder %s19, 0
      %p178 = por %p176, %p177
      %p179 = scmp.ne.s32.totalorder %s165, %s166
      %p180 = scmp.eq.s32.totalorder %s20, 1
      %p181 = por %p179, %p180
      %p183 = scmp.ne.s32.totalorder %s166, %s182
      %p184 = scmp.eq.s32.totalorder %s20, 0
      %p185 = por %p183, %p184
      %p186 = scmp.le.s32.totalorder 1, %s14
      %p187 = scmp.lt.s32.totalorder %s14, 3
      %p188 = pnand %p186, %p187
      %p189 = pneg %p188
      // Predicated region
      $region9: #{tpu_custom_call.1} parent=5 // pred_check
        _
      $region10: #{tpu_custom_call.1} parent=5 // pred_check_branch
        %191 = sbr.rel (%p188) target = $region12
      $region11: #{tpu_custom_call.1} parent=5 // pred_region
        %s192 = ssub.s32 %s14, 1
        // Predicated region
        $region13: #{tpu_custom_call.1} parent=11 // pred_check
          %p193 = pneg %p101
        $region14: #{tpu_custom_call.1} parent=11 // pred_check_branch
          %195 = sbr.rel (%p193) target = $region16
        $region15: #{tpu_custom_call.1} parent=11 // pred_region
          _
        $region16: #{tpu_custom_call.1} parent=11 // pred_fallthru
          _
        // Predicated region
        $region17: #{tpu_custom_call.1} parent=11 // pred_check
          %p196 = pneg %p122
        $region18: #{tpu_custom_call.1} parent=11 // pred_check_branch
          %198 = sbr.rel (%p196) target = $region20
        $region19: #{tpu_custom_call.1} parent=11 // pred_region
          _
        $region20: #{tpu_custom_call.1} parent=11 // pred_fallthru
          _
      $region12: #{tpu_custom_call.1} parent=5 // pred_fallthru
        _
      %p199 = scmp.lt.s32.totalorder %s14, 2
      // Predicated region
      $region21: #{tpu_custom_call.1} parent=5 // pred_check
        %p200 = pneg %p199
      $region22: #{tpu_custom_call.1} parent=5 // pred_check_branch
        %202 = sbr.rel (%p200) target = $region24
      $region23: #{tpu_custom_call.1} parent=5 // pred_region
        // Predicated region
        $region25: #{tpu_custom_call.1} parent=23 // pred_check
          %p203 = pneg %p48
        $region26: #{tpu_custom_call.1} parent=23 // pred_check_branch
          %205 = sbr.rel (%p203) target = $region28
        $region27: #{tpu_custom_call.1} parent=23 // pred_region
          %p206 = scmp.lt.s32.totalorder %s21, 1
          %s207 = scalar_select %p206, %s21, 1
          %p208 = scmp.lt.s32.totalorder %s22, 0
          %s209 = scalar_select %p208, %s22, 0
          %s210 = smul.addr %s207, 5
          %s211 = sadd.s32 %s209, %s210
          %s212 = smul.addr %s211, 8
          %s213 = scalar_lea.vmem %s0, %s212
        $region28: #{tpu_custom_call.1} parent=23 // pred_fallthru
          _
        // Predicated region
        $region29: #{tpu_custom_call.1} parent=23 // pred_check
          %p214 = pneg %p74
        $region30: #{tpu_custom_call.1} parent=23 // pred_check_branch
          %216 = sbr.rel (%p214) target = $region32
        $region31: #{tpu_custom_call.1} parent=23 // pred_region
          %p217 = scmp.lt.s32.totalorder %s21, 1
          %s218 = scalar_select %p217, %s21, 1
          %s219 = smul.addr %s218, 8
          %s220 = scalar_lea.vmem %s1, %s219
        $region32: #{tpu_custom_call.1} parent=23 // pred_fallthru
          _
        // Predicated region
        $region33: #{tpu_custom_call.1} parent=23 // pred_check
          %p221 = pneg %p144
        $region34: #{tpu_custom_call.1} parent=23 // pred_check_branch
          %223 = sbr.rel (%p221) target = $region36
        $region35: #{tpu_custom_call.1} parent=23 // pred_region
          %p224 = scmp.lt.s32.totalorder %s21, 1
          %s225 = scalar_select %p224, %s21, 1
          %p226 = scmp.lt.s32.totalorder %s22, 0
          %s227 = scalar_select %p226, %s22, 0
          %s228 = sadd.s32 %s227, %s225
          %s229 = scalar_lea.vmem %s4, %s228
        $region36: #{tpu_custom_call.1} parent=23 // pred_fallthru
          _
      $region24: #{tpu_custom_call.1} parent=5 // pred_fallthru
        _
      %p230 = scmp.le.s32.totalorder 1, %s14
      %p231 = scmp.lt.s32.totalorder %s14, 3
      %p232 = pnand %p230, %p231
      %p233 = pneg %p232
      // Predicated region
      $region37: #{tpu_custom_call.1} parent=5 // pred_check
        _
      $region38: #{tpu_custom_call.1} parent=5 // pred_check_branch
        %235 = sbr.rel (%p232) target = $region40
      $region39: #{tpu_custom_call.1} parent=5 // pred_region
        %s236 = ssub.s32 %s14, 1
        %p237 = scmp.lt.s32.totalorder %s23, 1
        %s238 = scalar_select %p237, %s23, 1
        %p239 = scmp.lt.s32.totalorder %s24, 0
        %s240 = scalar_select %p239, %s24, 0
        %s241 = smul.addr %s238, 5
        %s242 = sadd.s32 %s240, %s241
        %s243 = smul.addr %s242, 8
        %s244 = scalar_lea.vmem %s0, %s243
        %p245 = pneg %p54
        %p246 = pneg %p51
        %p247 = scmp.lt.s32.totalorder %s23, 1
        %s248 = scalar_select %p247, %s23, 1
        %s249 = smul.addr %s248, 8
        %s250 = scalar_lea.vmem %s1, %s249
        %p251 = pneg %p80
        %p252 = pneg %p77
        %p253 = pneg %p101
        %p254 = pneg %p98
        %p255 = pneg %p122
        %p256 = pneg %p119
        %p257 = scmp.lt.s32.totalorder %s23, 1
        %s258 = scalar_select %p257, %s23, 1
        %p259 = scmp.lt.s32.totalorder %s24, 0
        %s260 = scalar_select %p259, %s24, 0
        %s261 = sadd.s32 %s260, %s258
        %s262 = scalar_lea.vmem %s4, %s261
        %p263 = pneg %p150
        %p264 = pneg %p147
        %p265 = pneg %p178
        %p266 = pneg %p175
        %s267 = sand.u32 %s165, 1
        %s268 = scalar_lea.sflag [#allocation3], %s267
        %s269 = sand.u32 %s165, 1
        %s270 = smul.addr %s269, 8
        %s271 = scalar_lea.vmem [#allocation2], %s270
        %p272 = scmp.lt.s32.totalorder %s23, 1
        %s273 = scalar_select %p272, %s23, 1
        %p274 = scmp.lt.s32.totalorder %s24, 0
        %s275 = scalar_select %p274, %s24, 0
        %s276 = smul.addr %s273, 5
        %s277 = sadd.s32 %s275, %s276
        %s278 = smul.addr %s277, 8
        %s279 = scalar_lea.vmem %s0, %s278
        %p280 = scmp.lt.s32.totalorder %s23, 1
        %s281 = scalar_select %p280, %s23, 1
        %s282 = smul.addr %s281, 8
        %s283 = scalar_lea.vmem %s1, %s282
        %p284 = scmp.lt.s32.totalorder %s23, 1
        %s285 = scalar_select %p284, %s23, 1
        %p286 = scmp.lt.s32.totalorder %s24, 0
        %s287 = scalar_select %p286, %s24, 0
        %s288 = sadd.s32 %s287, %s285
        %s289 = scalar_lea.vmem %s4, %s288
        %v290 = vld [vmem:[%s283] sm:$0xff]
        %v291 = vld [vmem:[%s2] sm:$0xff]
        %v292 = vld [vmem:[%s2 + $0x8] sm:$0xff]
        %v293 = vld [vmem:[%s2 + $0x10] sm:$0xff]
        %v294 = vld [vmem:[%s2 + $0x18] sm:$0xff]
        %v295 = vld [vmem:[%s3] sm:$0x1]
        %v297 = vlaneseq
        %v298 = vshrl.u32 %v297, 7
        %v299 = vsub.s32 0, %v298
        %v300 = vrot.slane %v295, %v299
        %vm302 = vcmask 261120
        %v304 = vsel %vm302, %v290, 0
        %306 = vmatprep.subr.mxu0 0.0
        %307 = vmatpush1.msra.mxu0 0.0
        %308 = vmatprep.subr.mxu0 0.0
        %309 = vmatpush1.msra.mxu0 0.0
        %310 = vmatprep.subr.mxu0 0.0
        %311 = vmatpush1.msra.mxu0 0.0
        %312 = vmatprep.subr.mxu0 0.0
        %313 = vmatpush1.msra.mxu0 0.0
        %314 = vmatprep.subr.mxu0 0.0
        %315 = vmatpush1.msra.mxu0 0.0
        %316 = vmatprep.subr.mxu0 0.0
        %317 = vmatpush1.msra.mxu0 0.0
        %318 = vmatprep.subr.mxu0 0.0
        %319 = vmatpush1.msra.mxu0 0.0
        %320 = vmatprep.subr.mxu0 0.0
        %321 = vmatpush1.msra.mxu0 0.0
        %322 = vmatprep.subr.mxu0 0.0
        %323 = vmatpush1.msra.mxu0 0.0
        %324 = vmatprep.subr.mxu0 0.0
        %325 = vmatpush1.msra.mxu0 0.0
        %326 = vmatprep.subr.mxu0 0.0
        %327 = vmatpush1.msra.mxu0 0.0
        %328 = vmatprep.subr.mxu0 0.0
        %329 = vmatpush1.msra.mxu0 0.0
        %330 = vmatprep.subr.mxu0 0.0
        %331 = vmatpush1.msra.mxu0 %v294
        %332 = vmatprep.subr.mxu0 0.0
        %333 = vmatpush1.msra.mxu0 %v293
        %334 = vmatprep.subr.mxu0 0.0
        %335 = vmatpush1.msra.mxu0 %v292
        %336 = vmatprep.subr.mxu0 0.0
        %337 = vmatpush1.msra.mxu0 %v291
        %338 = vmatprep.subr.mxu0 0.0
        %339 = vmatpush2.msra.mxu0 0.0
        %340 = vmatprep.subr.mxu0 0.0
        %341 = vmatpush2.msra.mxu0 0.0
        %342 = vmatprep.subr.mxu0 0.0
        %343 = vmatpush2.msra.mxu0 0.0
        %344 = vmatprep.subr.mxu0 0.0
        %345 = vmatpush2.msra.mxu0 0.0
        %346 = vmatprep.subr.mxu0 0.0
        %347 = vmatpush2.msra.mxu0 0.0
        %348 = vmatprep.subr.mxu0 0.0
        %349 = vmatpush2.msra.mxu0 0.0
        %350 = vmatprep.subr.mxu0 0.0
        %351 = vmatpush2.msra.mxu0 0.0
        %352 = vmatprep.subr.mxu0 0.0
        %353 = vmatpush2.msra.mxu0 0.0
        %354 = vmatprep.subr.mxu0 0.0
        %355 = vmatpush2.msra.mxu0 0.0
        %356 = vmatprep.subr.mxu0 0.0
        %357 = vmatpush2.msra.mxu0 0.0
        %358 = vmatprep.subr.mxu0 0.0
        %359 = vmatpush2.msra.mxu0 0.0
        %360 = vmatprep.subr.mxu0 0.0
        %361 = vmatpush2.msra.mxu0 0.0
        %362 = vmatprep.subr.mxu0 0.0
        %363 = vmatpush2.msra.mxu0 0.0
        %364 = vmatprep.subr.mxu0 0.0
        %365 = vmatpush2.msra.mxu0 0.0
        %366 = vmatprep.subr.mxu0 0.0
        %367 = vmatpush2.msra.mxu0 0.0
        %368 = vmatprep.subr.mxu0 0.0
        %369 = vmatpush2.msra.mxu0 0.0
        %370 = vmatprep.mubr.f32.mxu0 0.0
        %371 = vmatmul.mubr.f32.gmra.mxu0 %v304
        %v372 = vpop.f32.mrf.mxu0
        %v373 = vadd.f32 %v300, %v372
        %v374 = vpop.f32.mrf.mxu0
        %375 = vdwg.mxu0
        %v376 = vld [vmem:[%s279] sm:$0xff]
        %v377 = vld [vmem:[%s279 + $0x8] sm:$0xff]
        %v378 = vld [vmem:[%s279 + $0x10] sm:$0xff]
        %v379 = vld [vmem:[%s279 + $0x18] sm:$0xff]
        %v380 = vld [vmem:[%s279 + $0x20] sm:$0x1]
        %vm381 = vcmask 269312
        %v383 = vsel %vm381, %v373, 0
        %vm385 = vcmask 1040384
        %v387 = vsel %vm385, %v380, 0
        %389 = vmatprep.subr.mxu0 0.0
        %390 = vmatpush1.msra.mxu0 0.0
        %391 = vmatprep.subr.mxu0 0.0
        %392 = vmatpush1.msra.mxu0 0.0
        %393 = vmatprep.subr.mxu0 0.0
        %394 = vmatpush1.msra.mxu0 0.0
        %395 = vmatprep.subr.mxu0 0.0
        %396 = vmatpush1.msra.mxu0 0.0
        %397 = vmatprep.subr.mxu0 0.0
        %398 = vmatpush1.msra.mxu0 0.0
        %399 = vmatprep.subr.mxu0 0.0
        %400 = vmatpush1.msra.mxu0 0.0
        %401 = vmatprep.subr.mxu0 0.0
        %402 = vmatpush1.msra.mxu0 0.0
        %403 = vmatprep.subr.mxu0 0.0
        %404 = vmatpush1.msra.mxu0 0.0
        %405 = vmatprep.subr.mxu0 0.0
        %406 = vmatpush1.msra.mxu0 0.0
        %407 = vmatprep.subr.mxu0 0.0
        %408 = vmatpush1.msra.mxu0 0.0
        %409 = vmatprep.subr.mxu0 0.0
        %410 = vmatpush1.msra.mxu0 0.0
        %411 = vmatprep.subr.mxu0 0.0
        %412 = vmatpush1.msra.mxu0 %v387
        %413 = vmatprep.subr.mxu0 0.0
        %414 = vmatpush1.msra.mxu0 %v379
        %415 = vmatprep.subr.mxu0 0.0
        %416 = vmatpush1.msra.mxu0 %v378
        %417 = vmatprep.subr.mxu0 0.0
        %418 = vmatpush1.msra.mxu0 %v377
        %419 = vmatprep.subr.mxu0 0.0
        %420 = vmatpush1.msra.mxu0 %v376
        %421 = vmatprep.subr.mxu0 0.0
        %422 = vmatpush2.msra.mxu0 0.0
        %423 = vmatprep.subr.mxu0 0.0
        %424 = vmatpush2.msra.mxu0 0.0
        %425 = vmatprep.subr.mxu0 0.0
        %426 = vmatpush2.msra.mxu0 0.0
        %427 = vmatprep.subr.mxu0 0.0
        %428 = vmatpush2.msra.mxu0 0.0
        %429 = vmatprep.subr.mxu0 0.0
        %430 = vmatpush2.msra.mxu0 0.0
        %431 = vmatprep.subr.mxu0 0.0
        %432 = vmatpush2.msra.mxu0 0.0
        %433 = vmatprep.subr.mxu0 0.0
        %434 = vmatpush2.msra.mxu0 0.0
        %435 = vmatprep.subr.mxu0 0.0
        %436 = vmatpush2.msra.mxu0 0.0
        %437 = vmatprep.subr.mxu0 0.0
        %438 = vmatpush2.msra.mxu0 0.0
        %439 = vmatprep.subr.mxu0 0.0
        %440 = vmatpush2.msra.mxu0 0.0
        %441 = vmatprep.subr.mxu0 0.0
        %442 = vmatpush2.msra.mxu0 0.0
        %443 = vmatprep.subr.mxu0 0.0
        %444 = vmatpush2.msra.mxu0 0.0
        %445 = vmatprep.subr.mxu0 0.0
        %446 = vmatpush2.msra.mxu0 0.0
        %447 = vmatprep.subr.mxu0 0.0
        %448 = vmatpush2.msra.mxu0 0.0
        %449 = vmatprep.subr.mxu0 0.0
        %450 = vmatpush2.msra.mxu0 0.0
        %451 = vmatprep.subr.mxu0 0.0
        %452 = vmatpush2.msra.mxu0 0.0
        %453 = vmatprep.mubr.f32.mxu0 0.0
        %454 = vmatmul.mubr.f32.gmra.mxu0 %v383
        %v455 = vpop.f32.mrf.mxu0
        %v456 = vadd.f32 0.0, %v455
        %v457 = vpop.f32.mrf.mxu0
        %458 = vdwg.mxu0
        %v459 = vld [vmem:[%s289] sm:$0x1]
        %vm460 = vcmp.eq.f32.partialorder %v459, 0.0
        %v461 = vsel %vm460, 1, 0
        %v462 = vlaneseq
        %v463 = vshrl.u32 %v462, 7
        %v464 = vsub.s32 0, %v463
        %v465 = vrot.slane %v461, %v464
        %vm466 = vcmp.eq.s32.totalorder %v465, 1
        %v467 = vsel %vm466, -1e+08, %v456
        %468 = vst [vmem:[%s271] sm:$0xff] %v467
        %s469 = sand.u32 %s165, 1
        %s470 = scalar_lea.sflag [#allocation3], %s469
        %s471 = sand.u32 %s165, 1
        %s472 = smul.addr %s471, 8
        %s473 = scalar_lea.vmem [#allocation2], %s472
        // Predicated region
        $region41: #{tpu_custom_call.1} parent=39 // pred_check
          %p474 = pneg %p175
        $region42: #{tpu_custom_call.1} parent=39 // pred_check_branch
          %476 = sbr.rel (%p474) target = $region44
        $region43: #{tpu_custom_call.1} parent=39 // pred_region
          %s478 = ssub.s32 128, 128
          %479 = vsyncadd %s470, %s478
          %s480 = sadd.s32 %s24, %s23
          %s481 = smul.addr %s480, 128
          %s482 = scalar_lea.hbm %s5, %s481
          %s484 = sshll.u32 %s473, 4
          %s485 = int_to_ptr.vmem [resolvable:$true] %s484
          %487 = dma.vmem_to_hbm [thread:$0]  %s485, 128, %s482, %s470
        $region44: #{tpu_custom_call.1} parent=39 // pred_fallthru
          _
      $region40: #{tpu_custom_call.1} parent=5 // pred_fallthru
        _
      %p488 = scmp.le.s32.totalorder 2, %s14
      // Predicated region
      $region45: #{tpu_custom_call.1} parent=5 // pred_check
        %p489 = pneg %p488
      $region46: #{tpu_custom_call.1} parent=5 // pred_check_branch
        %491 = sbr.rel (%p489) target = $region48
      $region47: #{tpu_custom_call.1} parent=5 // pred_region
        %s492 = ssub.s32 %s14, 2
        // Predicated region
        $region49: #{tpu_custom_call.1} parent=47 // pred_check
          %p493 = pneg %p181
        $region50: #{tpu_custom_call.1} parent=47 // pred_check_branch
          %495 = sbr.rel (%p493) target = $region52
        $region51: #{tpu_custom_call.1} parent=47 // pred_region
          %s496 = sand.u32 %s166, 1
          %s497 = scalar_lea.sflag [#allocation3], %s496
          %s498 = sand.u32 %s166, 1
          %s499 = smul.addr %s498, 8
          %s500 = scalar_lea.vmem [#allocation2], %s499
          %501 = dma.done %s497, 128
        $region52: #{tpu_custom_call.1} parent=47 // pred_fallthru
          _
      $region48: #{tpu_custom_call.1} parent=5 // pred_fallthru
        _
    $region6: #{tpu_custom_call.1} parent=1 // loop_footer
      %s18 = sadd.s32 1, %s14
    $region7: #{tpu_custom_call.1} parent=1 // loop_footer_branch
      %13 = sbr.rel target = $region3
    $region8: #{tpu_custom_call.1} parent=1 // loop_exit
      _
    %502 = vsyncpa [#allocation3], 1
    %s503 = scalar_lea.sflag [#allocation3], 1
    %504 = vsyncpa %s503, 1

</llo_original>
